<compile_context>
chip_gen: v5e
topology: v5e:2x2
jax: 0.10.0
libtpu: 0.0.40
codegen_flags: <defaults>
</compile_context>

<pallas_src>
import jax
import jax.numpy as jnp
from jax.experimental import pallas as pl
from jax.experimental.pallas import tpu as pltpu


OUT_PAD = 128   # lane-dense output width; real n_cls columns live in [:, :n_cls]
TM_MAX = 256    # row-tile cap: fits v5e's 16 MiB scoped-VMEM default with margin


def _round_up(x: int, m: int) -> int:
    return ((x + m - 1) // m) * m


def _cls_head_kernel(x_ref, w1_ref, b1_ref, w2_ref, b2_ref, o_ref):
    # x_ref:  (TM, 2H) bf16/f32      w1_ref: (2H, H)       bf16/f32
    # b1_ref: (1, H)   f32           w2_ref: (H, OUT_PAD)  bf16/f32
    # b2_ref: (1, OUT_PAD) f32       o_ref:  (TM, OUT_PAD) f32
    h = jnp.dot(x_ref[...], w1_ref[...], preferred_element_type=jnp.float32)
    h = jnp.tanh(h + b1_ref[...])                # f32 bias add + tanh (EUP)
    h = h.astype(w2_ref.dtype)                   # bf16 feed for the 2nd MXU pass
    out = jnp.dot(h, w2_ref[...], preferred_element_type=jnp.float32)
    o_ref[...] = (out + b2_ref[...]).astype(o_ref.dtype)
    # TODO(synk): if a bundle dump on v6e/v7x shows the tanh (EUP) phase exposed
    # after the MXU phase, sub-block this body with an unrolled lax.fori_loop
    # over 128-row chunks so matmul(i+1) overlaps tanh(i).


def _pick_row_tile(n_rows: int) -> int:
    """8-aligned row tile (or == n_rows), capped at TM_MAX, sized so the grid
    has >= 4 steps when possible (v7x megacore sharding + DMA/compute overlap)
    and the trailing partial block wastes few rows."""
    if n_rows <= 16:
        return n_rows                              # one block; dim == full dim is legal
    target_tiles = max(4, pl.cdiv(n_rows, TM_MAX))
    return max(8, _round_up(pl.cdiv(n_rows, target_tiles), 8))


def _resident_spec(block_shape, single_buffer: bool) -> pl.BlockSpec:
    """BlockSpec for an operand whose index_map is constant across the grid.
    Requests a single pipeline buffer (no pointless double-buffer) when the
    JAX version supports pipeline_mode."""
    idx = lambda i, _nd=len(block_shape): (0,) * _nd
    if single_buffer and hasattr(pl, "Buffered"):
        try:
            return pl.BlockSpec(block_shape, idx, pipeline_mode=pl.Buffered(1))
        except TypeError:   # older JAX without the pipeline_mode kwarg
            pass
    return pl.BlockSpec(block_shape, idx)


def roberta_classification_head(x, w_dense, b_dense, w_out, b_out, *, use_bf16=True):
    """Mirrors: x.reshape(-1, hidden*2) -> Linear(2H, H) -> tanh -> Linear(H, 2).

    Weights are stored [in_features, out_features] (== PyTorch weight.T).
    """
    two_h, hidden = w_dense.shape
    n_cls = w_out.shape[1]

    x2d = x.reshape(-1, two_h)                     # (N, 2H) glue reshape, no pad pass
    n_rows = x2d.shape[0]
    tm = _pick_row_tile(n_rows)
    num_tiles = pl.cdiv(n_rows, tm)                # trailing partial block: Pallas masks

    # bf16 MXU feed (f32 accumulation) for both matmuls; biases stay f32.
    mm_dtype = jnp.bfloat16 if use_bf16 else x2d.dtype
    x_in = x2d.astype(mm_dtype)
    w1 = w_dense.astype(mm_dtype)
    # Lane-dense second projection: pad the n_cls-wide matrix to 128 lanes (bf16).
    w2p = jnp.zeros((hidden, OUT_PAD), mm_dtype).at[:, :n_cls].set(
        w_out.astype(mm_dtype))
    b1 = b_dense.reshape(1, hidden).astype(jnp.float32)
    b2p = jnp.zeros((1, OUT_PAD), jnp.float32).at[:, :n_cls].set(
        b_out.reshape(1, n_cls).astype(jnp.float32))

    itm = jnp.dtype(mm_dtype).itemsize
    # Worst-case VMEM (everything double-buffered + f32/bf16 intermediates).
    vmem_need = (2 * tm * two_h * itm              # x tiles
                 + 2 * two_h * hidden * itm        # W1
                 + 2 * hidden * OUT_PAD * itm      # W2 (padded)
                 + 2 * (hidden + OUT_PAD) * 4      # biases
                 + 2 * tm * OUT_PAD * 4            # output tiles
                 + 2 * tm * hidden * 4)            # tanh / h intermediates
    # ~7 MiB at codet5-base sizes (H=768, TM=256).  32 MiB >= every chip's
    # scoped default (raises v5e's 16 MiB) and stays inside v7x's 64 MiB
    # physical VMEM; only grows (capped) if H is scaled far beyond 768.
    vmem_limit = int(max(32 * 2**20, min(2 * vmem_need, 48 * 2**20)))

    cost = pl.CostEstimate(
        flops=2 * n_rows * two_h * hidden + 2 * n_rows * hidden * OUT_PAD,
        transcendentals=n_rows * hidden,
        bytes_accessed=(x_in.size * itm + w1.size * itm + w2p.size * itm
                        + (b1.size + b2p.size) * 4 + n_rows * OUT_PAD * 4),
    )

    def _call(single_buffer_weights: bool):
        in_specs = [
            pl.BlockSpec((tm, two_h), lambda i: (i, 0)),               # x tile (pipelined)
            _resident_spec((two_h, hidden), single_buffer_weights),    # W1 resident
            _resident_spec((1, hidden), single_buffer_weights),        # b1 resident
            _resident_spec((hidden, OUT_PAD), single_buffer_weights),  # W2 (padded)
            _resident_spec((1, OUT_PAD), single_buffer_weights),       # b2 (padded)
        ]
        return pl.pallas_call(
            _cls_head_kernel,
            out_shape=jax.ShapeDtypeStruct((n_rows, OUT_PAD), jnp.float32),
            grid=(num_tiles,),
            in_specs=in_specs,
            out_specs=pl.BlockSpec((tm, OUT_PAD), lambda i: (i, 0)),
            compiler_params=pltpu.CompilerParams(
                dimension_semantics=("parallel",),   # shard row tiles across TCs (v7x)
                vmem_limit_bytes=vmem_limit,
            ),
            cost_estimate=cost,
        )(x_in, w1, b1, w2p, b2p)

    try:
        out = _call(True)
    except Exception:
        # pipeline_mode / Buffered(1) unsupported by this JAX/Mosaic: fall back
        # to default (double-buffered) resident specs.
        out = _call(False)

    # Slice off the zero-padded output lanes; padded trailing-block rows were
    # never written (masked stores), and n_rows rows are exactly what we keep.
    return out[:, :n_cls].astype(x.dtype)


if __name__ == "__main__":
    key = jax.random.PRNGKey(0)
    k_x1, k_x2, k_w1, k_b1, k_w2, k_b2 = jax.random.split(key, 6)

    hidden, n_cls = 32, 2

    # Parameters stored [in_features, out_features] (== PyTorch weight.T).
    w_dense = jax.random.normal(k_w1, (2 * hidden, hidden), dtype=jnp.float32) * 0.02
    b_dense = jax.random.normal(k_b1, (hidden,), dtype=jnp.float32) * 0.02
    w_out = jax.random.normal(k_w2, (hidden, n_cls), dtype=jnp.float32) * 0.02
    b_out = jax.random.normal(k_b2, (n_cls,), dtype=jnp.float32) * 0.02

    def ref_head(x):
        return jnp.tanh(x.reshape(-1, 2 * hidden) @ w_dense + b_dense) @ w_out + b_out

    # Case 1: tiny batch -> single full-array block.
    x1 = jax.random.normal(k_x1, (4, 2, hidden), dtype=jnp.float32)
    # Case 2: enough rows for a multi-tile grid with a partial trailing block.
    x2 = jax.random.normal(k_x2, (150, 2, hidden), dtype=jnp.float32)

    for x in (x1, x2):
        out = jax.block_until_ready(
            roberta_classification_head(x, w_dense, b_dense, w_out, b_out))
        ref = ref_head(x)
        assert out.shape == ref.shape, (out.shape, ref.shape)
        # bf16 MXU inputs (f32 accumulation) -> relaxed tolerance vs f32 ref.
        assert jnp.allclose(out, ref, atol=5e-3, rtol=5e-2), (
            f"max abs err {jnp.max(jnp.abs(out - ref))}")

    print("KERNEL_OK")
</pallas_src>

<mosaic_0001>
module attributes {stable_mosaic.version = 11 : i64} {
  func.func @_cls_head_kernel(%arg0: i32, %arg1: memref<4x64xbf16, #tpu.memory_space<vmem>>, %arg2: memref<64x32xbf16, #tpu.memory_space<vmem>>, %arg3: memref<1x32xf32, #tpu.memory_space<vmem>>, %arg4: memref<32x128xbf16, #tpu.memory_space<vmem>>, %arg5: memref<1x128xf32, #tpu.memory_space<vmem>>, %arg6: memref<4x128xf32, #tpu.memory_space<vmem>>) attributes {dimension_semantics = [#tpu.dimension_semantics<parallel>], iteration_bounds = array<i64: 1>, scalar_prefetch = 0 : i64, scratch_operands = 0 : i64, tpu.core_type = #tpu.core_type<tc>, window_params = [{transform_indices = @transform_0, window_bounds = array<i64: 4, 64>}, {pipeline_mode = #tpu.pipeline_mode<synchronous>, transform_indices = @transform_1, window_bounds = array<i64: 64, 32>}, {pipeline_mode = #tpu.pipeline_mode<synchronous>, transform_indices = @transform_2, window_bounds = array<i64: 1, 32>}, {pipeline_mode = #tpu.pipeline_mode<synchronous>, transform_indices = @transform_3, window_bounds = array<i64: 32, 128>}, {pipeline_mode = #tpu.pipeline_mode<synchronous>, transform_indices = @transform_4, window_bounds = array<i64: 1, 128>}, {transform_indices = @transform_5, window_bounds = array<i64: 4, 128>}]} {
    %c0 = arith.constant 0 : index
    %c0_0 = arith.constant 0 : index
    %0 = vector.load %arg1[%c0, %c0_0] : memref<4x64xbf16, #tpu.memory_space<vmem>>, vector<4x64xbf16>
    %c0_1 = arith.constant 0 : index
    %c0_2 = arith.constant 0 : index
    %1 = vector.load %arg2[%c0_1, %c0_2] : memref<64x32xbf16, #tpu.memory_space<vmem>>, vector<64x32xbf16>
    %cst = arith.constant dense<0.000000e+00> : vector<4x32xf32>
    %2 = tpu.matmul %0, %1, %cst {dimension_numbers = #tpu.dot_dimension_numbers<[1], [0], [0], [1], [0, 0, 1, 1], [], []>} : vector<4x64xbf16>, vector<64x32xbf16>, vector<4x32xf32> -> vector<4x32xf32>
    %c0_3 = arith.constant 0 : index
    %c0_4 = arith.constant 0 : index
    %3 = vector.load %arg3[%c0_3, %c0_4] : memref<1x32xf32, #tpu.memory_space<vmem>>, vector<1x32xf32>
    %4 = vector.broadcast %3 : vector<1x32xf32> to vector<4x32xf32>
    %5 = arith.addf %2, %4 : vector<4x32xf32>
    %6 = math.tanh %5 : vector<4x32xf32>
    %7 = arith.truncf %6 : vector<4x32xf32> to vector<4x32xbf16>
    %c0_5 = arith.constant 0 : index
    %c0_6 = arith.constant 0 : index
    %8 = vector.load %arg4[%c0_5, %c0_6] : memref<32x128xbf16, #tpu.memory_space<vmem>>, vector<32x128xbf16>
    %cst_7 = arith.constant dense<0.000000e+00> : vector<4x128xf32>
    %9 = tpu.matmul %7, %8, %cst_7 {dimension_numbers = #tpu.dot_dimension_numbers<[1], [0], [0], [1], [0, 0, 1, 1], [], []>} : vector<4x32xbf16>, vector<32x128xbf16>, vector<4x128xf32> -> vector<4x128xf32>
    %c0_8 = arith.constant 0 : index
    %c0_9 = arith.constant 0 : index
    %10 = vector.load %arg5[%c0_8, %c0_9] : memref<1x128xf32, #tpu.memory_space<vmem>>, vector<1x128xf32>
    %11 = vector.broadcast %10 : vector<1x128xf32> to vector<4x128xf32>
    %12 = arith.addf %9, %11 : vector<4x128xf32>
    %c0_10 = arith.constant 0 : index
    %c0_11 = arith.constant 0 : index
    %13 = vector.load %arg6[%c0_10, %c0_11] : memref<4x128xf32, #tpu.memory_space<vmem>>, vector<4x128xf32>
    tpu.vector_store %arg6[%c0_10, %c0_11], %12 {strides = array<i32>} : memref<4x128xf32, #tpu.memory_space<vmem>>, vector<4x128xf32>,
    return
  }
  func.func @transform_0(%arg0: i32) -> (i32, i32) {
    %c0_i32 = arith.constant 0 : i32
    %c0_i32_0 = arith.constant 0 : i32
    return %arg0, %c0_i32 : i32, i32
  }
  func.func @transform_1(%arg0: i32) -> (i32, i32) {
    %c0_i32 = arith.constant 0 : i32
    %c0_i32_0 = arith.constant 0 : i32
    %c0_i32_1 = arith.constant 0 : i32
    return %c0_i32, %c0_i32_0 : i32, i32
  }
  func.func @transform_2(%arg0: i32) -> (i32, i32) {
    %c0_i32 = arith.constant 0 : i32
    %c0_i32_0 = arith.constant 0 : i32
    %c0_i32_1 = arith.constant 0 : i32
    return %c0_i32, %c0_i32_0 : i32, i32
  }
  func.func @transform_3(%arg0: i32) -> (i32, i32) {
    %c0_i32 = arith.constant 0 : i32
    %c0_i32_0 = arith.constant 0 : i32
    %c0_i32_1 = arith.constant 0 : i32
    return %c0_i32, %c0_i32_0 : i32, i32
  }
  func.func @transform_4(%arg0: i32) -> (i32, i32) {
    %c0_i32 = arith.constant 0 : i32
    %c0_i32_0 = arith.constant 0 : i32
    %c0_i32_1 = arith.constant 0 : i32
    return %c0_i32, %c0_i32_0 : i32, i32
  }
  func.func @transform_5(%arg0: i32) -> (i32, i32) {
    %c0_i32 = arith.constant 0 : i32
    %c0_i32_0 = arith.constant 0 : i32
    return %arg0, %c0_i32 : i32, i32
  }
}

module attributes {stable_mosaic.version = 11 : i64} {
  func.func @_cls_head_kernel(%arg0: i32, %arg1: memref<4x64xbf16, #tpu.memory_space<vmem>>, %arg2: memref<64x32xbf16, #tpu.memory_space<vmem>>, %arg3: memref<1x32xf32, #tpu.memory_space<vmem>>, %arg4: memref<32x128xbf16, #tpu.memory_space<vmem>>, %arg5: memref<1x128xf32, #tpu.memory_space<vmem>>, %arg6: memref<4x128xf32, #tpu.memory_space<vmem>>) attributes {dimension_semantics = [#tpu.dimension_semantics<parallel>], iteration_bounds = array<i64: 1>, scalar_prefetch = 0 : i64, scratch_operands = 0 : i64, tpu.core_type = #tpu.core_type<tc>, window_params = [{transform_indices = @transform_0, window_bounds = array<i64: 4, 64>}, {pipeline_mode = #tpu.pipeline_mode<synchronous>, transform_indices = @transform_1, window_bounds = array<i64: 64, 32>}, {pipeline_mode = #tpu.pipeline_mode<synchronous>, transform_indices = @transform_2, window_bounds = array<i64: 1, 32>}, {pipeline_mode = #tpu.pipeline_mode<synchronous>, transform_indices = @transform_3, window_bounds = array<i64: 32, 128>}, {pipeline_mode = #tpu.pipeline_mode<synchronous>, transform_indices = @transform_4, window_bounds = array<i64: 1, 128>}, {transform_indices = @transform_5, window_bounds = array<i64: 4, 128>}]} {
    %c0 = arith.constant 0 : index
    %c0_0 = arith.constant 0 : index
    %0 = vector.load %arg1[%c0, %c0_0] : memref<4x64xbf16, #tpu.memory_space<vmem>>, vector<4x64xbf16>
    %c0_1 = arith.constant 0 : index
    %c0_2 = arith.constant 0 : index
    %1 = vector.load %arg2[%c0_1, %c0_2] : memref<64x32xbf16, #tpu.memory_space<vmem>>, vector<64x32xbf16>
    %cst = arith.constant dense<0.000000e+00> : vector<4x32xf32>
    %2 = tpu.matmul %0, %1, %cst {dimension_numbers = #tpu.dot_dimension_numbers<[1], [0], [0], [1], [0, 0, 1, 1], [], []>} : vector<4x64xbf16>, vector<64x32xbf16>, vector<4x32xf32> -> vector<4x32xf32>
    %c0_3 = arith.constant 0 : index
    %c0_4 = arith.constant 0 : index
    %3 = vector.load %arg3[%c0_3, %c0_4] : memref<1x32xf32, #tpu.memory_space<vmem>>, vector<1x32xf32>
    %4 = vector.broadcast %3 : vector<1x32xf32> to vector<4x32xf32>
    %5 = arith.addf %2, %4 : vector<4x32xf32>
    %6 = math.tanh %5 : vector<4x32xf32>
    %7 = arith.truncf %6 : vector<4x32xf32> to vector<4x32xbf16>
    %c0_5 = arith.constant 0 : index
    %c0_6 = arith.constant 0 : index
    %8 = vector.load %arg4[%c0_5, %c0_6] : memref<32x128xbf16, #tpu.memory_space<vmem>>, vector<32x128xbf16>
    %cst_7 = arith.constant dense<0.000000e+00> : vector<4x128xf32>
    %9 = tpu.matmul %7, %8, %cst_7 {dimension_numbers = #tpu.dot_dimension_numbers<[1], [0], [0], [1], [0, 0, 1, 1], [], []>} : vector<4x32xbf16>, vector<32x128xbf16>, vector<4x128xf32> -> vector<4x128xf32>
    %c0_8 = arith.constant 0 : index
    %c0_9 = arith.constant 0 : index
    %10 = vector.load %arg5[%c0_8, %c0_9] : memref<1x128xf32, #tpu.memory_space<vmem>>, vector<1x128xf32>
    %11 = vector.broadcast %10 : vector<1x128xf32> to vector<4x128xf32>
    %12 = arith.addf %9, %11 : vector<4x128xf32>
    %c0_10 = arith.constant 0 : index
    %c0_11 = arith.constant 0 : index
    %13 = vector.load %arg6[%c0_10, %c0_11] : memref<4x128xf32, #tpu.memory_space<vmem>>, vector<4x128xf32>
    tpu.vector_store %arg6[%c0_10, %c0_11], %12 {strides = array<i32>} : memref<4x128xf32, #tpu.memory_space<vmem>>, vector<4x128xf32>,
    return
  }
  func.func @transform_0(%arg0: i32) -> (i32, i32) {
    %c0_i32 = arith.constant 0 : i32
    %c0_i32_0 = arith.constant 0 : i32
    return %arg0, %c0_i32 : i32, i32
  }
  func.func @transform_1(%arg0: i32) -> (i32, i32) {
    %c0_i32 = arith.constant 0 : i32
    %c0_i32_0 = arith.constant 0 : i32
    %c0_i32_1 = arith.constant 0 : i32
    return %c0_i32, %c0_i32_0 : i32, i32
  }
  func.func @transform_2(%arg0: i32) -> (i32, i32) {
    %c0_i32 = arith.constant 0 : i32
    %c0_i32_0 = arith.constant 0 : i32
    %c0_i32_1 = arith.constant 0 : i32
    return %c0_i32, %c0_i32_0 : i32, i32
  }
  func.func @transform_3(%arg0: i32) -> (i32, i32) {
    %c0_i32 = arith.constant 0 : i32
    %c0_i32_0 = arith.constant 0 : i32
    %c0_i32_1 = arith.constant 0 : i32
    return %c0_i32, %c0_i32_0 : i32, i32
  }
  func.func @transform_4(%arg0: i32) -> (i32, i32) {
    %c0_i32 = arith.constant 0 : i32
    %c0_i32_0 = arith.constant 0 : i32
    %c0_i32_1 = arith.constant 0 : i32
    return %c0_i32, %c0_i32_0 : i32, i32
  }
  func.func @transform_5(%arg0: i32) -> (i32, i32) {
    %c0_i32 = arith.constant 0 : i32
    %c0_i32_0 = arith.constant 0 : i32
    return %arg0, %c0_i32 : i32, i32
  }
}

</mosaic_0001>

<llo_original>
// kernel: tpu_custom_call.1
$region0: #{tpu_custom_call.1}
  #allocation0 [shape = 'u32[]', space=smem, size = 0x4, offset = 0x4, fixed_abs, tag = 'smem constant byte address 0x4 - core index']
  #allocation1 [shape = 'u32[72,128]{1,0:T(1,128)}', space=vmem, size = 0x9000, scoped, tag = 'internal scratch']
  %s0 = inlined_call_operand.vmem [shape: bf16[4,64], index: 0, kind: input, shape index: {}]
  %s1 = inlined_call_operand.vmem [shape: bf16[64,32], index: 1, kind: input, shape index: {}]
  %s2 = inlined_call_operand.vmem [shape: f32[1,32], index: 2, kind: input, shape index: {}]
  %s3 = inlined_call_operand.vmem [shape: bf16[32,128], index: 3, kind: input, shape index: {}]
  %s4 = inlined_call_operand.vmem [shape: f32[1,128], index: 4, kind: input, shape index: {}]
  %s5 = inlined_call_operand.hbm [shape: f32[4,128], index: 5, kind: output, shape index: {}]
  %s6 = sld [smem:[#allocation0]]
  $region30: #{tpu_custom_call.1} parent=0
    _
  %s8 = ssub.s32 1, %s6
  %s9 = scalar_select 0, %s8, %s6
  $region1: #{tpu_custom_call.1} parent=0
    #allocation2 [shape = 'u8[2048]{0}', space=vmem, size = 0x800, scoped, tag = 'output window, operand 0, single buffered']
    #allocation3 [shape = 's32[1]{0}', space=sflag, size = 0x4, scoped, tag = 'scoped memory for tpu_custom_call.1']
    %10 = vsyncpa [#allocation3], 0
    // Predicated region
    $region2: #{tpu_custom_call.1} parent=1 // pred_check
      _
    $region3: #{tpu_custom_call.1} parent=1 // pred_check_branch
      %12 = sbr.rel (0) target = $region5
    $region4: #{tpu_custom_call.1} parent=1 // pred_region
      _
    $region5: #{tpu_custom_call.1} parent=1 // pred_fallthru
      _
    // Predicated region
    $region6: #{tpu_custom_call.1} parent=1 // pred_check
      _
    $region7: #{tpu_custom_call.1} parent=1 // pred_check_branch
      %14 = sbr.rel (0) target = $region9
    $region8: #{tpu_custom_call.1} parent=1 // pred_region
      _
    $region9: #{tpu_custom_call.1} parent=1 // pred_fallthru
      _
    // Predicated region
    $region10: #{tpu_custom_call.1} parent=1 // pred_check
      _
    $region11: #{tpu_custom_call.1} parent=1 // pred_check_branch
      %16 = sbr.rel (0) target = $region13
    $region12: #{tpu_custom_call.1} parent=1 // pred_region
      _
    $region13: #{tpu_custom_call.1} parent=1 // pred_fallthru
      _
    // Predicated region
    $region14: #{tpu_custom_call.1} parent=1 // pred_check
      _
    $region15: #{tpu_custom_call.1} parent=1 // pred_check_branch
      %18 = sbr.rel (0) target = $region17
    $region16: #{tpu_custom_call.1} parent=1 // pred_region
      _
    $region17: #{tpu_custom_call.1} parent=1 // pred_fallthru
      _
    // Predicated region
    $region18: #{tpu_custom_call.1} parent=1 // pred_check
      _
    $region19: #{tpu_custom_call.1} parent=1 // pred_check_branch
      %20 = sbr.rel (0) target = $region21
    $region20: #{tpu_custom_call.1} parent=1 // pred_region
      _
    $region21: #{tpu_custom_call.1} parent=1 // pred_fallthru
      _
    %v22 = vld [vmem:[%s0] sm:$0x3]
    %v23 = vld [vmem:[%s1] sm:$0xf]
    %v24 = vld [vmem:[%s1 + $0x4] sm:$0xf]
    %v25 = vld [vmem:[%s1 + $0x8] sm:$0xf]
    %v26 = vld [vmem:[%s1 + $0xc] sm:$0xf]
    %v27 = vld [vmem:[%s1 + $0x10] sm:$0xf]
    %v28 = vld [vmem:[%s1 + $0x14] sm:$0xf]
    %v29 = vld [vmem:[%s1 + $0x18] sm:$0xf]
    %v30 = vld [vmem:[%s1 + $0x1c] sm:$0xf]
    %v31 = vld [vmem:[%s2] sm:$0x1]
    %v33 = vperm.slane %v31, 0
    %v43 = vunpack.c.l.b16 %v23
    %v44 = vunpack.c.l.b16 %v24
    %v45 = vunpack.c.l.b16 %v25
    %v46 = vunpack.c.l.b16 %v26
    %v47 = vunpack.c.l.b16 %v27
    %v48 = vunpack.c.l.b16 %v28
    %v49 = vunpack.c.l.b16 %v29
    %v50 = vunpack.c.l.b16 %v30
    %v51 = vpack.c.b16 %v44, %v43
    %v52 = vpack.c.b16 %v46, %v45
    %v53 = vpack.c.b16 %v48, %v47
    %v54 = vpack.c.b16 %v50, %v49
    %vm59 = vcmask 523264
    %v61 = vsel %vm59, %v22, 0
    %63 = vmatpush.bf16.msra.mxu0 0
    %64 = vmatpush.bf16.msra.mxu0 0
    %65 = vmatpush.bf16.msra.mxu0 0
    %66 = vmatpush.bf16.msra.mxu0 0
    %67 = vmatpush.bf16.msra.mxu0 %v54
    %68 = vmatpush.bf16.msra.mxu0 %v53
    %69 = vmatpush.bf16.msra.mxu0 %v52
    %70 = vmatpush.bf16.msra.mxu0 %v51
    %71 = vmatmul.bf16.gmra.mxu0 %v61
    %v72 = vpop.f32.mrf.mxu0
    %v73 = vadd.f32 %v33, %v72
    %v74 = vpop.f32.mrf.mxu0
    %75 = vdwg.mxu0
    %v76 = vtanh.pop %v73
    %v77 = vpack.c.bf16 %v76, %v76
    %v78 = vld [vmem:[%s3] sm:$0xf]
    %v79 = vld [vmem:[%s3 + $0x4] sm:$0xf]
    %v80 = vld [vmem:[%s3 + $0x8] sm:$0xf]
    %v81 = vld [vmem:[%s3 + $0xc] sm:$0xf]
    %v82 = vld [vmem:[%s4] sm:$0x1]
    %v84 = vperm.slane %v82, 0
    %v90 = vunpack.c.l.b16 %v78
    %v91 = vunpack.c.l.b16 %v79
    %v92 = vunpack.c.l.b16 %v80
    %v93 = vunpack.c.l.b16 %v81
    %v94 = vpack.c.b16 %v91, %v90
    %v95 = vpack.c.b16 %v93, %v92
    %vm98 = vcmask 261120
    %v100 = vsel %vm98, %v77, 0
    %102 = vmatpush.bf16.msra.mxu0 0
    %103 = vmatpush.bf16.msra.mxu0 0
    %104 = vmatpush.bf16.msra.mxu0 0
    %105 = vmatpush.bf16.msra.mxu0 0
    %106 = vmatpush.bf16.msra.mxu0 0
    %107 = vmatpush.bf16.msra.mxu0 0
    %108 = vmatpush.bf16.msra.mxu0 %v95
    %109 = vmatpush.bf16.msra.mxu0 %v94
    %110 = vmatmul.bf16.gmra.mxu0 %v100
    %v111 = vpop.f32.mrf.mxu0
    %v112 = vadd.f32 %v84, %v111
    %v113 = vpop.f32.mrf.mxu0
    %114 = vdwg.mxu0
    %115 = vst [vmem:[#allocation2] sm:$0xf] %v112
    // Predicated region
    $region22: #{tpu_custom_call.1} parent=1 // pred_check
      _
    $region23: #{tpu_custom_call.1} parent=1 // pred_check_branch
      %117 = sbr.rel (0) target = $region25
    $region24: #{tpu_custom_call.1} parent=1 // pred_region
      %119 = vsyncadd [#allocation3], 0
      %s121 = sshll.u32 [#allocation2], 4
      %s122 = int_to_ptr.vmem [resolvable:$true] %s121
      %s123 = sshll.u32 %s5, 4
      %s124 = int_to_ptr.hbm [resolvable:$true] %s123
      %126 = dma.vmem_to_hbm [thread:$0]  %s122, 64, %s124, [#allocation3]
    $region25: #{tpu_custom_call.1} parent=1 // pred_fallthru
      _
    // Predicated region
    $region26: #{tpu_custom_call.1} parent=1 // pred_check
      _
    $region27: #{tpu_custom_call.1} parent=1 // pred_check_branch
      %128 = sbr.rel (0) target = $region29
    $region28: #{tpu_custom_call.1} parent=1 // pred_region
      %130 = dma.done [#allocation3], 64
    $region29: #{tpu_custom_call.1} parent=1 // pred_fallthru
      _
    %131 = vsyncpa [#allocation3], 1

// kernel: tpu_custom_call.1
$region0: #{tpu_custom_call.1}
  #allocation0 [shape = 'u32[]', space=smem, size = 0x4, offset = 0x4, fixed_abs, tag = 'smem constant byte address 0x4 - core index']
  #allocation1 [shape = 'u32[72,128]{1,0:T(1,128)}', space=vmem, size = 0x9000, scoped, tag = 'internal scratch']
  %s0 = inlined_call_operand.vmem [shape: bf16[4,64], index: 0, kind: input, shape index: {}]
  %s1 = inlined_call_operand.vmem [shape: bf16[64,32], index: 1, kind: input, shape index: {}]
  %s2 = inlined_call_operand.vmem [shape: f32[1,32], index: 2, kind: input, shape index: {}]
  %s3 = inlined_call_operand.vmem [shape: bf16[32,128], index: 3, kind: input, shape index: {}]
  %s4 = inlined_call_operand.vmem [shape: f32[1,128], index: 4, kind: input, shape index: {}]
  %s5 = inlined_call_operand.hbm [shape: f32[4,128], index: 5, kind: output, shape index: {}]
  %s6 = sld [smem:[#allocation0]]
  $region30: #{tpu_custom_call.1} parent=0
    _
  %s8 = ssub.s32 1, %s6
  %s9 = scalar_select 0, %s8, %s6
  $region1: #{tpu_custom_call.1} parent=0
    #allocation2 [shape = 'u8[2048]{0}', space=vmem, size = 0x800, scoped, tag = 'output window, operand 0, single buffered']
    #allocation3 [shape = 's32[1]{0}', space=sflag, size = 0x4, scoped, tag = 'scoped memory for tpu_custom_call.1']
    %10 = vsyncpa [#allocation3], 0
    // Predicated region
    $region2: #{tpu_custom_call.1} parent=1 // pred_check
      _
    $region3: #{tpu_custom_call.1} parent=1 // pred_check_branch
      %12 = sbr.rel (0) target = $region5
    $region4: #{tpu_custom_call.1} parent=1 // pred_region
      _
    $region5: #{tpu_custom_call.1} parent=1 // pred_fallthru
      _
    // Predicated region
    $region6: #{tpu_custom_call.1} parent=1 // pred_check
      _
    $region7: #{tpu_custom_call.1} parent=1 // pred_check_branch
      %14 = sbr.rel (0) target = $region9
    $region8: #{tpu_custom_call.1} parent=1 // pred_region
      _
    $region9: #{tpu_custom_call.1} parent=1 // pred_fallthru
      _
    // Predicated region
    $region10: #{tpu_custom_call.1} parent=1 // pred_check
      _
    $region11: #{tpu_custom_call.1} parent=1 // pred_check_branch
      %16 = sbr.rel (0) target = $region13
    $region12: #{tpu_custom_call.1} parent=1 // pred_region
      _
    $region13: #{tpu_custom_call.1} parent=1 // pred_fallthru
      _
    // Predicated region
    $region14: #{tpu_custom_call.1} parent=1 // pred_check
      _
    $region15: #{tpu_custom_call.1} parent=1 // pred_check_branch
      %18 = sbr.rel (0) target = $region17
    $region16: #{tpu_custom_call.1} parent=1 // pred_region
      _
    $region17: #{tpu_custom_call.1} parent=1 // pred_fallthru
      _
    // Predicated region
    $region18: #{tpu_custom_call.1} parent=1 // pred_check
      _
    $region19: #{tpu_custom_call.1} parent=1 // pred_check_branch
      %20 = sbr.rel (0) target = $region21
    $region20: #{tpu_custom_call.1} parent=1 // pred_region
      _
    $region21: #{tpu_custom_call.1} parent=1 // pred_fallthru
      _
    %v22 = vld [vmem:[%s0] sm:$0x3]
    %v23 = vld [vmem:[%s1] sm:$0xf]
    %v24 = vld [vmem:[%s1 + $0x4] sm:$0xf]
    %v25 = vld [vmem:[%s1 + $0x8] sm:$0xf]
    %v26 = vld [vmem:[%s1 + $0xc] sm:$0xf]
    %v27 = vld [vmem:[%s1 + $0x10] sm:$0xf]
    %v28 = vld [vmem:[%s1 + $0x14] sm:$0xf]
    %v29 = vld [vmem:[%s1 + $0x18] sm:$0xf]
    %v30 = vld [vmem:[%s1 + $0x1c] sm:$0xf]
    %v31 = vld [vmem:[%s2] sm:$0x1]
    %v33 = vperm.slane %v31, 0
    %v43 = vunpack.c.l.b16 %v23
    %v44 = vunpack.c.l.b16 %v24
    %v45 = vunpack.c.l.b16 %v25
    %v46 = vunpack.c.l.b16 %v26
    %v47 = vunpack.c.l.b16 %v27
    %v48 = vunpack.c.l.b16 %v28
    %v49 = vunpack.c.l.b16 %v29
    %v50 = vunpack.c.l.b16 %v30
    %v51 = vpack.c.b16 %v44, %v43
    %v52 = vpack.c.b16 %v46, %v45
    %v53 = vpack.c.b16 %v48, %v47
    %v54 = vpack.c.b16 %v50, %v49
    %vm59 = vcmask 523264
    %v61 = vsel %vm59, %v22, 0
    %63 = vmatpush.bf16.msra.mxu0 0
    %64 = vmatpush.bf16.msra.mxu0 0
    %65 = vmatpush.bf16.msra.mxu0 0
    %66 = vmatpush.bf16.msra.mxu0 0
    %67 = vmatpush.bf16.msra.mxu0 %v54
    %68 = vmatpush.bf16.msra.mxu0 %v53
    %69 = vmatpush.bf16.msra.mxu0 %v52
    %70 = vmatpush.bf16.msra.mxu0 %v51
    %71 = vmatmul.bf16.gmra.mxu0 %v61
    %v72 = vpop.f32.mrf.mxu0
    %v73 = vadd.f32 %v33, %v72
    %v74 = vpop.f32.mrf.mxu0
    %75 = vdwg.mxu0
    %v76 = vtanh.pop %v73
    %v77 = vpack.c.bf16 %v76, %v76
    %v78 = vld [vmem:[%s3] sm:$0xf]
    %v79 = vld [vmem:[%s3 + $0x4] sm:$0xf]
    %v80 = vld [vmem:[%s3 + $0x8] sm:$0xf]
    %v81 = vld [vmem:[%s3 + $0xc] sm:$0xf]
    %v82 = vld [vmem:[%s4] sm:$0x1]
    %v84 = vperm.slane %v82, 0
    %v90 = vunpack.c.l.b16 %v78
    %v91 = vunpack.c.l.b16 %v79
    %v92 = vunpack.c.l.b16 %v80
    %v93 = vunpack.c.l.b16 %v81
    %v94 = vpack.c.b16 %v91, %v90
    %v95 = vpack.c.b16 %v93, %v92
    %vm98 = vcmask 261120
    %v100 = vsel %vm98, %v77, 0
    %102 = vmatpush.bf16.msra.mxu0 0
    %103 = vmatpush.bf16.msra.mxu0 0
    %104 = vmatpush.bf16.msra.mxu0 0
    %105 = vmatpush.bf16.msra.mxu0 0
    %106 = vmatpush.bf16.msra.mxu0 0
    %107 = vmatpush.bf16.msra.mxu0 0
    %108 = vmatpush.bf16.msra.mxu0 %v95
    %109 = vmatpush.bf16.msra.mxu0 %v94
    %110 = vmatmul.bf16.gmra.mxu0 %v100
    %v111 = vpop.f32.mrf.mxu0
    %v112 = vadd.f32 %v84, %v111
    %v113 = vpop.f32.mrf.mxu0
    %114 = vdwg.mxu0
    %115 = vst [vmem:[#allocation2] sm:$0xf] %v112
    // Predicated region
    $region22: #{tpu_custom_call.1} parent=1 // pred_check
      _
    $region23: #{tpu_custom_call.1} parent=1 // pred_check_branch
      %117 = sbr.rel (0) target = $region25
    $region24: #{tpu_custom_call.1} parent=1 // pred_region
      %119 = vsyncadd [#allocation3], 0
      %s121 = sshll.u32 [#allocation2], 4
      %s122 = int_to_ptr.vmem [resolvable:$true] %s121
      %s123 = sshll.u32 %s5, 4
      %s124 = int_to_ptr.hbm [resolvable:$true] %s123
      %126 = dma.vmem_to_hbm [thread:$0]  %s122, 64, %s124, [#allocation3]
    $region25: #{tpu_custom_call.1} parent=1 // pred_fallthru
      _
    // Predicated region
    $region26: #{tpu_custom_call.1} parent=1 // pred_check
      _
    $region27: #{tpu_custom_call.1} parent=1 // pred_check_branch
      %128 = sbr.rel (0) target = $region29
    $region28: #{tpu_custom_call.1} parent=1 // pred_region
      %130 = dma.done [#allocation3], 64
    $region29: #{tpu_custom_call.1} parent=1 // pred_fallthru
      _
    %131 = vsyncpa [#allocation3], 1

</llo_original>
